<compile_context>
chip_gen: v7x
topology: tpu7x:2x2x1
jax: 0.10.0
libtpu: 0.0.40
codegen_flags: <defaults>
</compile_context>

<pallas_src>
import functools

import jax
import jax.numpy as jnp
from jax.experimental import pallas as pl
from jax.experimental.pallas import tpu as pltpu

_LANE = 128
_SUBLANE = 8


def _round_up(n, m):
    return ((n + m - 1) // m) * m


def _mlp_kernel(x_ref, w1_ref, b1_ref, w2t_ref, b2_ref, o_ref):
    # Layer 1 (MXU): (tb, F) @ (F, Hp) + (1, Hp), then ReLU.
    # The hidden activation stays in vregs/VMEM — no HBM round trip.
    h = jnp.dot(x_ref[...], w1_ref[...], preferred_element_type=jnp.float32)
    h = jnp.maximum(h + b1_ref[...], 0.0)
    # Layer 2 (MXU), produced directly in transposed space:
    #   contract Hp of both operands: (O8, Hp) x (tb, Hp)^T -> (O8, tb).
    # Batch is the lane axis of the store, so the writeback slab is 16x
    # smaller than a (tb, 128) layout while the vst stays unmasked.
    out_t = jax.lax.dot_general(
        w2t_ref[...], h,
        dimension_numbers=(((1,), (1,)), ((), ())),
        preferred_element_type=jnp.float32)
    o_ref[...] = (out_t + b2_ref[...]).astype(o_ref.dtype)


def prepare_params(w1, b1, w2, b2):
    """One-time parameter prep (outside the jitted forward hot path).

    PyTorch Linear stores weights as (out_features, in_features).
      w1 (H, F) -> w1p (F, Hp)   transposed; hidden padded to 128 lanes
      b1 (H,)   -> b1p (1, Hp)
      w2 (O, H) -> w2t (O8, Hp)  kept in (out, in) layout; out padded to 8 sublanes
      b2 (O,)   -> b2c (O8, 1)   column bias for the transposed output
    Zero padding keeps the math exact: padded hidden units are 0 after ReLU
    and hit zero columns of w2t; padded output rows are sliced off.
    """
    n_hidden, n_feature = w1.shape
    n_output = w2.shape[0]
    hp = _round_up(n_hidden, _LANE)
    o8 = _round_up(n_output, _SUBLANE)

    w1p = jnp.zeros((n_feature, hp), jnp.float32).at[:, :n_hidden].set(w1.T)
    b1p = jnp.zeros((1, hp), jnp.float32).at[:, :n_hidden].set(b1)
    w2t = jnp.zeros((o8, hp), jnp.float32).at[:n_output, :n_hidden].set(w2)
    b2c = jnp.zeros((o8, 1), jnp.float32).at[:n_output, 0].set(b2)
    return w1p, b1p, w2t, b2c, n_output


@functools.partial(jax.jit, static_argnames=("n_output", "tile_b"))
def net_two_class_forward(x, w1p, b1p, w2t, b2c, *, n_output, tile_b=1024):
    """Forward pass of Net_two_class on pre-prepared (padded) params.

    x   : (B, n_feature) float32
    w1p : (n_feature, H_pad), b1p : (1, H_pad)
    w2t : (O_pad8, H_pad),    b2c : (O_pad8, 1)
    returns (B, n_output) float32
    """
    B, F = x.shape
    hp = w1p.shape[1]
    o8 = w2t.shape[0]

    # Tiny-batch fallback: below one lane tile a pallas_call is pure launch /
    # pipeline-prologue overhead — use the identical fused XLA expression.
    if B < _LANE:
        h = jnp.maximum(x @ w1p + b1p, 0.0)
        out = h @ w2t.T + b2c[:, 0]
        return out[:, :n_output]

    # Batch tile: it is the LANE axis of the transposed output => multiple of
    # 128. Cap it so the grid has >= 2 steps (lets the "parallel" axis split
    # across both TensorCores on v7x); for large B grow it toward tile_b
    # (default 1024) to amortize the ~0.35us per-grid-step overhead.
    tb = min(tile_b, _round_up(pl.cdiv(B, 2), _LANE))
    tb = max(_LANE, _round_up(tb, _LANE))
    b_pad = _round_up(B, tb)
    if b_pad != B:
        # Negligible extra pass at small F; padded rows are sliced off below.
        x = jnp.pad(x, ((0, b_pad - B), (0, 0)))

    grid = (b_pad // tb,)

    flops = 2 * b_pad * F * hp + 2 * b_pad * hp * o8
    bytes_accessed = 4 * (b_pad * F + F * hp + hp + o8 * hp + o8 + o8 * b_pad)
    # Resident weights + double-buffered x/out tiles + hidden activation.
    vmem_need = 4 * ((F + o8 + 1) * hp + o8          # resident params
                     + 2 * (tb * F + o8 * tb)         # double-buffered I/O tiles
                     + tb * hp)                       # hidden activation
    vmem_limit = min(32 * 1024 * 1024, max(16 * 1024 * 1024, 2 * vmem_need))

    out_t = pl.pallas_call(
        _mlp_kernel,
        out_shape=jax.ShapeDtypeStruct((o8, b_pad), jnp.float32),
        grid=grid,
        in_specs=[
            pl.BlockSpec((tb, F), lambda i: (i, 0)),    # x batch tile
            pl.BlockSpec((F, hp), lambda i: (0, 0)),    # w1 (resident)
            pl.BlockSpec((1, hp), lambda i: (0, 0)),    # b1 (resident)
            pl.BlockSpec((o8, hp), lambda i: (0, 0)),   # w2 (resident, (out,in))
            pl.BlockSpec((o8, 1), lambda i: (0, 0)),    # b2 column (resident)
        ],
        out_specs=pl.BlockSpec((o8, tb), lambda i: (0, i)),
        compiler_params=pltpu.CompilerParams(
            dimension_semantics=("parallel",),
            vmem_limit_bytes=int(vmem_limit)),
        cost_estimate=pl.CostEstimate(
            flops=flops, transcendentals=0, bytes_accessed=bytes_accessed),
    )(x, w1p, b1p, w2t, b2c)

    # Slice the small (O8, B_pad) slab (16x smaller than before) and return
    # the module's canonical (B, n_output) layout.
    return out_t[:n_output, :B].T


if __name__ == "__main__":
    # Module defaults: n_feature=2, n_hidden=6, n_output=2.
    n_feature, n_hidden, n_output = 2, 6, 2
    batch = 256  # two 128-row lane tiles -> grid of 2 "parallel" steps

    key = jax.random.PRNGKey(0)
    k_x, k_w1, k_b1, k_w2, k_b2 = jax.random.split(key, 5)

    x = jax.random.normal(k_x, (batch, n_feature), dtype=jnp.float32)

    # Deterministic synthetic parameters (PyTorch Linear shapes: (out, in)).
    bound1 = 1.0 / (n_feature ** 0.5)
    w1 = jax.random.uniform(k_w1, (n_hidden, n_feature), jnp.float32, -bound1, bound1)
    b1 = jax.random.uniform(k_b1, (n_hidden,), jnp.float32, -bound1, bound1)
    bound2 = 1.0 / (n_hidden ** 0.5)
    w2 = jax.random.uniform(k_w2, (n_output, n_hidden), jnp.float32, -bound2, bound2)
    b2 = jax.random.uniform(k_b2, (n_output,), jnp.float32, -bound2, bound2)

    # One-time parameter prep (transpose + padding), then the kernel call.
    w1p, b1p, w2t, b2c, n_out = prepare_params(w1, b1, w2, b2)
    out = net_two_class_forward(x, w1p, b1p, w2t, b2c, n_output=n_out, tile_b=1024)
    jax.block_until_ready(out)

    # Pure-JAX reference check against the original (untouched) params.
    ref = jnp.maximum(x @ w1.T + b1, 0.0) @ w2.T + b2
    assert out.shape == (batch, n_output)
    assert jnp.allclose(out, ref, atol=1e-5, rtol=1e-5)

    print("KERNEL_OK")
</pallas_src>

<mosaic_0001>
module attributes {stable_mosaic.version = 11 : i64} {
  func.func @_mlp_kernel(%arg0: i32, %arg1: memref<128x2xf32, #tpu.memory_space<vmem>>, %arg2: memref<2x128xf32, #tpu.memory_space<vmem>>, %arg3: memref<1x128xf32, #tpu.memory_space<vmem>>, %arg4: memref<8x128xf32, #tpu.memory_space<vmem>>, %arg5: memref<8x1xf32, #tpu.memory_space<vmem>>, %arg6: memref<8x128xf32, #tpu.memory_space<vmem>>) attributes {dimension_semantics = [#tpu.dimension_semantics<parallel>], iteration_bounds = array<i64: 2>, scalar_prefetch = 0 : i64, scratch_operands = 0 : i64, tpu.core_type = #tpu.core_type<tc>, window_params = [{transform_indices = @transform_0, window_bounds = array<i64: 128, 2>}, {pipeline_mode = #tpu.pipeline_mode<synchronous>, transform_indices = @transform_1, window_bounds = array<i64: 2, 128>}, {pipeline_mode = #tpu.pipeline_mode<synchronous>, transform_indices = @transform_2, window_bounds = array<i64: 1, 128>}, {pipeline_mode = #tpu.pipeline_mode<synchronous>, transform_indices = @transform_3, window_bounds = array<i64: 8, 128>}, {pipeline_mode = #tpu.pipeline_mode<synchronous>, transform_indices = @transform_4, window_bounds = array<i64: 8, 1>}, {transform_indices = @transform_5, window_bounds = array<i64: 8, 128>}]} {
    %c0 = arith.constant 0 : index
    %c0_0 = arith.constant 0 : index
    %0 = vector.load %arg1[%c0, %c0_0] : memref<128x2xf32, #tpu.memory_space<vmem>>, vector<128x2xf32>
    %c0_1 = arith.constant 0 : index
    %c0_2 = arith.constant 0 : index
    %1 = vector.load %arg2[%c0_1, %c0_2] : memref<2x128xf32, #tpu.memory_space<vmem>>, vector<2x128xf32>
    %cst = arith.constant dense<0.000000e+00> : vector<128x128xf32>
    %2 = tpu.matmul %0, %1, %cst {dimension_numbers = #tpu.dot_dimension_numbers<[1], [0], [0], [1], [0, 0, 1, 1], [], []>} : vector<128x2xf32>, vector<2x128xf32>, vector<128x128xf32> -> vector<128x128xf32>
    %c0_3 = arith.constant 0 : index
    %c0_4 = arith.constant 0 : index
    %3 = vector.load %arg3[%c0_3, %c0_4] : memref<1x128xf32, #tpu.memory_space<vmem>>, vector<1x128xf32>
    %4 = vector.broadcast %3 : vector<1x128xf32> to vector<128x128xf32>
    %5 = arith.addf %2, %4 : vector<128x128xf32>
    %cst_5 = arith.constant 0.000000e+00 : f32
    %6 = vector.broadcast %cst_5 : f32 to vector<128x128xf32>
    %7 = arith.maximumf %5, %6 : vector<128x128xf32>
    %c0_6 = arith.constant 0 : index
    %c0_7 = arith.constant 0 : index
    %8 = vector.load %arg4[%c0_6, %c0_7] : memref<8x128xf32, #tpu.memory_space<vmem>>, vector<8x128xf32>
    %cst_8 = arith.constant dense<0.000000e+00> : vector<8x128xf32>
    %9 = tpu.matmul %8, %7, %cst_8 {dimension_numbers = #tpu.dot_dimension_numbers<[1], [1], [0], [0], [0, 0, 1, 0], [], []>} : vector<8x128xf32>, vector<128x128xf32>, vector<8x128xf32> -> vector<8x128xf32>
    %c0_9 = arith.constant 0 : index
    %c0_10 = arith.constant 0 : index
    %10 = vector.load %arg5[%c0_9, %c0_10] : memref<8x1xf32, #tpu.memory_space<vmem>>, vector<8x1xf32>
    %11 = vector.broadcast %10 : vector<8x1xf32> to vector<8x128xf32>
    %12 = arith.addf %9, %11 : vector<8x128xf32>
    %c0_11 = arith.constant 0 : index
    %c0_12 = arith.constant 0 : index
    %13 = vector.load %arg6[%c0_11, %c0_12] : memref<8x128xf32, #tpu.memory_space<vmem>>, vector<8x128xf32>
    tpu.vector_store %arg6[%c0_11, %c0_12], %12 {strides = array<i32>} : memref<8x128xf32, #tpu.memory_space<vmem>>, vector<8x128xf32>,
    return
  }
  func.func @transform_0(%arg0: i32) -> (i32, i32) {
    %c0_i32 = arith.constant 0 : i32
    %c0_i32_0 = arith.constant 0 : i32
    return %arg0, %c0_i32 : i32, i32
  }
  func.func @transform_1(%arg0: i32) -> (i32, i32) {
    %c0_i32 = arith.constant 0 : i32
    %c0_i32_0 = arith.constant 0 : i32
    %c0_i32_1 = arith.constant 0 : i32
    return %c0_i32, %c0_i32_0 : i32, i32
  }
  func.func @transform_2(%arg0: i32) -> (i32, i32) {
    %c0_i32 = arith.constant 0 : i32
    %c0_i32_0 = arith.constant 0 : i32
    %c0_i32_1 = arith.constant 0 : i32
    return %c0_i32, %c0_i32_0 : i32, i32
  }
  func.func @transform_3(%arg0: i32) -> (i32, i32) {
    %c0_i32 = arith.constant 0 : i32
    %c0_i32_0 = arith.constant 0 : i32
    %c0_i32_1 = arith.constant 0 : i32
    return %c0_i32, %c0_i32_0 : i32, i32
  }
  func.func @transform_4(%arg0: i32) -> (i32, i32) {
    %c0_i32 = arith.constant 0 : i32
    %c0_i32_0 = arith.constant 0 : i32
    %c0_i32_1 = arith.constant 0 : i32
    return %c0_i32, %c0_i32_0 : i32, i32
  }
  func.func @transform_5(%arg0: i32) -> (i32, i32) {
    %c0_i32 = arith.constant 0 : i32
    %c0_i32_0 = arith.constant 0 : i32
    return %c0_i32, %arg0 : i32, i32
  }
}

</mosaic_0001>

<llo_original>
// kernel: net_two_class_forward.1
$region0: #{net_two_class_forward.1}
  #allocation0 [shape = 'u32[]', space=smem, size = 0x4, offset = 0x4, fixed_abs, tag = 'smem constant byte address 0x4 - core index']
  #allocation1 [shape = 'u32[144,128]{1,0:T(1,128)}', space=vmem, size = 0x12000, scoped, tag = 'internal scratch']
  %s0 = inlined_call_operand.vmem [shape: f32[256,2], index: 0, kind: input, shape index: {}]
  %s1 = inlined_call_operand.vmem [shape: f32[2,128], index: 1, kind: input, shape index: {}]
  %s2 = inlined_call_operand.vmem [shape: f32[1,128], index: 2, kind: input, shape index: {}]
  %s3 = inlined_call_operand.vmem [shape: f32[8,128], index: 3, kind: input, shape index: {}]
  %s4 = inlined_call_operand.vmem [shape: f32[8,1], index: 4, kind: input, shape index: {}]
  %s5 = inlined_call_operand.vmem [shape: f32[8,256], index: 5, kind: output, shape index: {}]
  %s6 = sld [smem:[#allocation0]]
  $region53: #{net_two_class_forward.1} parent=0
    _
  %s8 = ssub.s32 1, %s6
  %s9 = scalar_select 0, %s8, %s6
  loop: start=0, step=1, limit=4
  $region2: #{net_two_class_forward.1} parent=0 // loop_pre_header
    _
  $region3: #{net_two_class_forward.1} parent=0 // loop_header
    %s11 = sphi 0, %s15
    %p12 = scmp.ge.s32.totalorder %s11, 4
    %s21 = sphi 0, %s23
    %s24 = sphi 0, %s21
    %s25 = sphi 0, %s24
    %s41 = sphi 0, %s25
    %s45 = sphi 0, %s45
    %s47 = sphi 0, %s45
    %s48 = sphi 0, %s47
    %s62 = sphi 0, %s48
    %s66 = sphi 0, %s66
    %s68 = sphi 0, %s66
    %s69 = sphi 0, %s68
    %s83 = sphi 0, %s69
    %s87 = sphi 0, %s87
    %s89 = sphi 0, %s87
    %s90 = sphi 0, %s89
    %s104 = sphi 0, %s90
    %s108 = sphi 0, %s108
    %s110 = sphi 0, %s108
    %s111 = sphi 0, %s110
    %s125 = sphi 0, %s111
    %s131 = sphi 0, %s133
    %s134 = sphi 0, %s131
    %s135 = sphi 0, %s134
    %s151 = sphi 0, %s135
  $region4: #{net_two_class_forward.1} parent=0 // loop_header_branch
    %14 = sbr.rel (%p12) target = $region8
  $region5: #{net_two_class_forward.1} parent=0 // loop_body
    %s16 = ssub.s32 %s11, 1
    %s17 = ssub.s32 %s11, 2
    %s18 = sadd.s32 %s11, 1
    %s19 = ssub.s32 %s11, %s18
    %p20 = scmp.eq.s32.totalorder %s19, 0
    %s22 = sadd.s32 %s21, 1
    %s23 = scalar_select %p20, %s21, %s22
    %p26 = pneg %p20
    %p27 = scmp.eq.s32.totalorder %s11, 1
    %p28 = por %p26, %p27
    %p29 = scmp.ne.s32.totalorder %s21, %s24
    %p30 = scmp.eq.s32.totalorder %s11, 0
    %p31 = por %p29, %p30
    %p32 = scmp.ne.s32.totalorder %s21, %s24
    %p33 = scmp.eq.s32.totalorder %s16, 1
    %p34 = por %p32, %p33
    %p35 = scmp.ne.s32.totalorder %s24, %s25
    %p36 = scmp.eq.s32.totalorder %s16, 0
    %p37 = por %p35, %p36
    %p38 = scmp.ne.s32.totalorder %s24, %s25
    %p39 = scmp.eq.s32.totalorder %s17, 1
    %p40 = por %p38, %p39
    %p42 = scmp.ne.s32.totalorder %s25, %s41
    %p43 = scmp.eq.s32.totalorder %s17, 0
    %p44 = por %p42, %p43
    %s46 = sadd.s32 %s45, 1
    %p49 = scmp.eq.s32.totalorder %s11, 1
    %p50 = scmp.ne.s32.totalorder %s45, %s47
    %p51 = scmp.eq.s32.totalorder %s11, 0
    %p52 = por %p50, %p51
    %p53 = scmp.ne.s32.totalorder %s45, %s47
    %p54 = scmp.eq.s32.totalorder %s16, 1
    %p55 = por %p53, %p54
    %p56 = scmp.ne.s32.totalorder %s47, %s48
    %p57 = scmp.eq.s32.totalorder %s16, 0
    %p58 = por %p56, %p57
    %p59 = scmp.ne.s32.totalorder %s47, %s48
    %p60 = scmp.eq.s32.totalorder %s17, 1
    %p61 = por %p59, %p60
    %p63 = scmp.ne.s32.totalorder %s48, %s62
    %p64 = scmp.eq.s32.totalorder %s17, 0
    %p65 = por %p63, %p64
    %s67 = sadd.s32 %s66, 1
    %p70 = scmp.eq.s32.totalorder %s11, 1
    %p71 = scmp.ne.s32.totalorder %s66, %s68
    %p72 = scmp.eq.s32.totalorder %s11, 0
    %p73 = por %p71, %p72
    %p74 = scmp.ne.s32.totalorder %s66, %s68
    %p75 = scmp.eq.s32.totalorder %s16, 1
    %p76 = por %p74, %p75
    %p77 = scmp.ne.s32.totalorder %s68, %s69
    %p78 = scmp.eq.s32.totalorder %s16, 0
    %p79 = por %p77, %p78
    %p80 = scmp.ne.s32.totalorder %s68, %s69
    %p81 = scmp.eq.s32.totalorder %s17, 1
    %p82 = por %p80, %p81
    %p84 = scmp.ne.s32.totalorder %s69, %s83
    %p85 = scmp.eq.s32.totalorder %s17, 0
    %p86 = por %p84, %p85
    %s88 = sadd.s32 %s87, 1
    %p91 = scmp.eq.s32.totalorder %s11, 1
    %p92 = scmp.ne.s32.totalorder %s87, %s89
    %p93 = scmp.eq.s32.totalorder %s11, 0
    %p94 = por %p92, %p93
    %p95 = scmp.ne.s32.totalorder %s87, %s89
    %p96 = scmp.eq.s32.totalorder %s16, 1
    %p97 = por %p95, %p96
    %p98 = scmp.ne.s32.totalorder %s89, %s90
    %p99 = scmp.eq.s32.totalorder %s16, 0
    %p100 = por %p98, %p99
    %p101 = scmp.ne.s32.totalorder %s89, %s90
    %p102 = scmp.eq.s32.totalorder %s17, 1
    %p103 = por %p101, %p102
    %p105 = scmp.ne.s32.totalorder %s90, %s104
    %p106 = scmp.eq.s32.totalorder %s17, 0
    %p107 = por %p105, %p106
    %s109 = sadd.s32 %s108, 1
    %p112 = scmp.eq.s32.totalorder %s11, 1
    %p113 = scmp.ne.s32.totalorder %s108, %s110
    %p114 = scmp.eq.s32.totalorder %s11, 0
    %p115 = por %p113, %p114
    %p116 = scmp.ne.s32.totalorder %s108, %s110
    %p117 = scmp.eq.s32.totalorder %s16, 1
    %p118 = por %p116, %p117
    %p119 = scmp.ne.s32.totalorder %s110, %s111
    %p120 = scmp.eq.s32.totalorder %s16, 0
    %p121 = por %p119, %p120
    %p122 = scmp.ne.s32.totalorder %s110, %s111
    %p123 = scmp.eq.s32.totalorder %s17, 1
    %p124 = por %p122, %p123
    %p126 = scmp.ne.s32.totalorder %s111, %s125
    %p127 = scmp.eq.s32.totalorder %s17, 0
    %p128 = por %p126, %p127
    %s129 = ssub.s32 %s11, %s18
    %p130 = scmp.eq.s32.totalorder %s129, 0
    %s132 = sadd.s32 %s131, 1
    %s133 = scalar_select %p130, %s131, %s132
    %p136 = pneg %p130
    %p137 = scmp.eq.s32.totalorder %s11, 1
    %p138 = por %p136, %p137
    %p139 = scmp.ne.s32.totalorder %s131, %s134
    %p140 = scmp.eq.s32.totalorder %s11, 0
    %p141 = por %p139, %p140
    %p142 = scmp.ne.s32.totalorder %s131, %s134
    %p143 = scmp.eq.s32.totalorder %s16, 1
    %p144 = por %p142, %p143
    %p145 = scmp.ne.s32.totalorder %s134, %s135
    %p146 = scmp.eq.s32.totalorder %s16, 0
    %p147 = por %p145, %p146
    %p148 = scmp.ne.s32.totalorder %s134, %s135
    %p149 = scmp.eq.s32.totalorder %s17, 1
    %p150 = por %p148, %p149
    %p152 = scmp.ne.s32.totalorder %s135, %s151
    %p153 = scmp.eq.s32.totalorder %s17, 0
    %p154 = por %p152, %p153
    %p155 = scmp.le.s32.totalorder 1, %s11
    %p156 = scmp.lt.s32.totalorder %s11, 3
    %p157 = pnand %p155, %p156
    %p158 = pneg %p157
    // Predicated region
    $region9: #{net_two_class_forward.1} parent=5 // pred_check
      _
    $region10: #{net_two_class_forward.1} parent=5 // pred_check_branch
      %160 = sbr.rel (%p157) target = $region12
    $region11: #{net_two_class_forward.1} parent=5 // pred_region
      %s161 = ssub.s32 %s11, 1
      // Predicated region
      $region13: #{net_two_class_forward.1} parent=11 // pred_check
        %p162 = pneg %p58
      $region14: #{net_two_class_forward.1} parent=11 // pred_check_branch
        %164 = sbr.rel (%p162) target = $region16
      $region15: #{net_two_class_forward.1} parent=11 // pred_region
        _
      $region16: #{net_two_class_forward.1} parent=11 // pred_fallthru
        _
      // Predicated region
      $region17: #{net_two_class_forward.1} parent=11 // pred_check
        %p165 = pneg %p79
      $region18: #{net_two_class_forward.1} parent=11 // pred_check_branch
        %167 = sbr.rel (%p165) target = $region20
      $region19: #{net_two_class_forward.1} parent=11 // pred_region
        _
      $region20: #{net_two_class_forward.1} parent=11 // pred_fallthru
        _
      // Predicated region
      $region21: #{net_two_class_forward.1} parent=11 // pred_check
        %p168 = pneg %p100
      $region22: #{net_two_class_forward.1} parent=11 // pred_check_branch
        %170 = sbr.rel (%p168) target = $region24
      $region23: #{net_two_class_forward.1} parent=11 // pred_region
        _
      $region24: #{net_two_class_forward.1} parent=11 // pred_fallthru
        _
      // Predicated region
      $region25: #{net_two_class_forward.1} parent=11 // pred_check
        %p171 = pneg %p121
      $region26: #{net_two_class_forward.1} parent=11 // pred_check_branch
        %173 = sbr.rel (%p171) target = $region28
      $region27: #{net_two_class_forward.1} parent=11 // pred_region
        _
      $region28: #{net_two_class_forward.1} parent=11 // pred_fallthru
        _
    $region12: #{net_two_class_forward.1} parent=5 // pred_fallthru
      _
    %p174 = scmp.lt.s32.totalorder %s11, 2
    // Predicated region
    $region29: #{net_two_class_forward.1} parent=5 // pred_check
      %p175 = pneg %p174
    $region30: #{net_two_class_forward.1} parent=5 // pred_check_branch
      %177 = sbr.rel (%p175) target = $region32
    $region31: #{net_two_class_forward.1} parent=5 // pred_region
      // Predicated region
      $region33: #{net_two_class_forward.1} parent=31 // pred_check
        %p178 = pneg %p31
      $region34: #{net_two_class_forward.1} parent=31 // pred_check_branch
        %180 = sbr.rel (%p178) target = $region36
      $region35: #{net_two_class_forward.1} parent=31 // pred_region
        %s181 = smul.u32 16, %s11
        %p182 = scmp.lt.s32.totalorder %s181, 31
        %s183 = scalar_select %p182, %s181, 31
        %s184 = smul.addr %s183, 8
        %s185 = scalar_lea.vmem %s0, %s184
        %s186 = smul.u32 16, %s11
      $region36: #{net_two_class_forward.1} parent=31 // pred_fallthru
        _
    $region32: #{net_two_class_forward.1} parent=5 // pred_fallthru
      _
    %p187 = scmp.le.s32.totalorder 1, %s11
    %p188 = scmp.lt.s32.totalorder %s11, 3
    %p189 = pnand %p187, %p188
    %p190 = pneg %p189
    // Predicated region
    $region37: #{net_two_class_forward.1} parent=5 // pred_check
      _
    $region38: #{net_two_class_forward.1} parent=5 // pred_check_branch
      %192 = sbr.rel (%p189) target = $region40
    $region39: #{net_two_class_forward.1} parent=5 // pred_region
      %s193 = ssub.s32 %s11, 1
      %s194 = smul.u32 16, %s16
      %p195 = scmp.lt.s32.totalorder %s194, 31
      %s196 = scalar_select %p195, %s194, 31
      %s197 = smul.addr %s196, 8
      %s198 = scalar_lea.vmem %s0, %s197
      %p199 = pneg %p37
      %p200 = pneg %p34
      %p201 = pneg %p58
      %p202 = pneg %p55
      %p203 = pneg %p79
      %p204 = pneg %p76
      %p205 = pneg %p100
      %p206 = pneg %p97
      %p207 = pneg %p121
      %p208 = pneg %p118
      %p209 = pneg %p147
      %p210 = pneg %p144
      %p211 = scmp.lt.s32.totalorder %s16, 1
      %s212 = scalar_select %p211, %s16, 1
      %s213 = smul.addr %s212, 8
      %s214 = scalar_lea.vmem %s5, %s213
      %s215 = smul.u32 16, %s16
      %p216 = scmp.lt.s32.totalorder %s215, 31
      %s217 = scalar_select %p216, %s215, 31
      %s218 = smul.addr %s217, 8
      %s219 = scalar_lea.vmem %s0, %s218
      %s220 = smul.u32 16, %s16
      %p221 = scmp.lt.s32.totalorder %s16, 1
      %s222 = scalar_select %p221, %s16, 1
      %s223 = smul.addr %s222, 8
      %s224 = scalar_lea.vmem %s5, %s223
      %v225 = vld [vmem:[%s219] sm:$0xff]
      %v226 = vld [vmem:[%s219 + $0x8] sm:$0xff]
      %v227 = vld [vmem:[%s219 + $0x10] sm:$0xff]
      %v228 = vld [vmem:[%s219 + $0x18] sm:$0xff]
      %v229 = vld [vmem:[%s219 + $0x20] sm:$0xff]
      %v230 = vld [vmem:[%s219 + $0x28] sm:$0xff]
      %v231 = vld [vmem:[%s219 + $0x30] sm:$0xff]
      %v232 = vld [vmem:[%s219 + $0x38] sm:$0xff]
      %v233 = vld [vmem:[%s219 + $0x40] sm:$0xff]
      %v234 = vld [vmem:[%s219 + $0x48] sm:$0xff]
      %v235 = vld [vmem:[%s219 + $0x50] sm:$0xff]
      %v236 = vld [vmem:[%s219 + $0x58] sm:$0xff]
      %v237 = vld [vmem:[%s219 + $0x60] sm:$0xff]
      %v238 = vld [vmem:[%s219 + $0x68] sm:$0xff]
      %v239 = vld [vmem:[%s219 + $0x70] sm:$0xff]
      %v240 = vld [vmem:[%s219 + $0x78] sm:$0xff]
      %v241 = vld [vmem:[%s1] sm:$0x3]
      %v242 = vld [vmem:[%s2] sm:$0x1]
      %v244 = vlaneseq
      %v245 = vshrl.u32 %v244, 7
      %v246 = vsub.s32 0, %v245
      %v247 = vrot.slane %v242, %v246
      %vm249 = vcmask 15360
      %v251 = vsel %vm249, %v225, 0
      %v254 = vsel %vm249, %v226, 0
      %v257 = vsel %vm249, %v227, 0
      %v260 = vsel %vm249, %v228, 0
      %v263 = vsel %vm249, %v229, 0
      %v266 = vsel %vm249, %v230, 0
      %v269 = vsel %vm249, %v231, 0
      %v272 = vsel %vm249, %v232, 0
      %v275 = vsel %vm249, %v233, 0
      %v278 = vsel %vm249, %v234, 0
      %v281 = vsel %vm249, %v235, 0
      %v284 = vsel %vm249, %v236, 0
      %v287 = vsel %vm249, %v237, 0
      %v290 = vsel %vm249, %v238, 0
      %v293 = vsel %vm249, %v239, 0
      %v296 = vsel %vm249, %v240, 0
      %vm298 = vcmask 1041408
      %v300 = vsel %vm298, %v241, 0
      %302 = vmatprep.subr.mxu0 0.0
      %303 = vmatpush1.msra.mxu0 %v300
      %304 = vmatprep.subr.mxu0 0.0
      %305 = vmatpush1.msra.mxu0 0.0
      %306 = vmatprep.subr.mxu0 0.0
      %307 = vmatpush1.msra.mxu0 0.0
      %308 = vmatprep.subr.mxu0 0.0
      %309 = vmatpush1.msra.mxu0 0.0
      %310 = vmatprep.subr.mxu0 0.0
      %311 = vmatpush1.msra.mxu0 0.0
      %312 = vmatprep.subr.mxu0 0.0
      %313 = vmatpush1.msra.mxu0 0.0
      %314 = vmatprep.subr.mxu0 0.0
      %315 = vmatpush1.msra.mxu0 0.0
      %316 = vmatprep.subr.mxu0 0.0
      %317 = vmatpush1.msra.mxu0 0.0
      %318 = vmatprep.subr.mxu0 0.0
      %319 = vmatpush1.msra.mxu0 0.0
      %320 = vmatprep.subr.mxu0 0.0
      %321 = vmatpush1.msra.mxu0 0.0
      %322 = vmatprep.subr.mxu0 0.0
      %323 = vmatpush1.msra.mxu0 0.0
      %324 = vmatprep.subr.mxu0 0.0
      %325 = vmatpush1.msra.mxu0 0.0
      %326 = vmatprep.subr.mxu0 0.0
      %327 = vmatpush1.msra.mxu0 0.0
      %328 = vmatprep.subr.mxu0 0.0
      %329 = vmatpush1.msra.mxu0 0.0
      %330 = vmatprep.subr.mxu0 0.0
      %331 = vmatpush1.msra.mxu0 0.0
      %332 = vmatprep.subr.mxu0 0.0
      %333 = vmatpush1.msra.mxu0 0.0
      %334 = vmatprep.subr.mxu0 0.0
      %335 = vmatpush1.msra.mxu0 0.0
      %336 = vmatprep.subr.mxu0 0.0
      %337 = vmatpush1.msra.mxu0 0.0
      %338 = vmatprep.subr.mxu0 0.0
      %339 = vmatpush1.msra.mxu0 0.0
      %340 = vmatprep.subr.mxu0 0.0
      %341 = vmatpush1.msra.mxu0 0.0
      %342 = vmatprep.subr.mxu0 0.0
      %343 = vmatpush1.msra.mxu0 0.0
      %344 = vmatprep.subr.mxu0 0.0
      %345 = vmatpush1.msra.mxu0 0.0
      %346 = vmatprep.subr.mxu0 0.0
      %347 = vmatpush1.msra.mxu0 0.0
      %348 = vmatprep.subr.mxu0 0.0
      %349 = vmatpush1.msra.mxu0 0.0
      %350 = vmatprep.subr.mxu0 0.0
      %351 = vmatpush1.msra.mxu0 0.0
      %352 = vmatprep.subr.mxu0 0.0
      %353 = vmatpush1.msra.mxu0 0.0
      %354 = vmatprep.subr.mxu0 0.0
      %355 = vmatpush1.msra.mxu0 0.0
      %356 = vmatprep.subr.mxu0 0.0
      %357 = vmatpush1.msra.mxu0 0.0
      %358 = vmatprep.subr.mxu0 0.0
      %359 = vmatpush1.msra.mxu0 0.0
      %360 = vmatprep.subr.mxu0 0.0
      %361 = vmatpush1.msra.mxu0 0.0
      %362 = vmatprep.subr.mxu0 0.0
      %363 = vmatpush1.msra.mxu0 0.0
      %364 = vmatprep.subr.mxu0 0.0
      %365 = vmatpush1.msra.mxu0 0.0
      %366 = vmatprep.mubr.f32.mxu0 0.0
      %367 = vmatmul.mubr.f32.gmra.mrb[0].mxu0 %v251
      %v368 = vpop.f32.mrb[0].mxu0
      %v369 = vadd.f32 %v247, %v368
      %v370 = vpop.f32.mrb[0].mxu0
      %371 = vmatprep.mubr.f32.mxu0 0.0
      %372 = vmatmul.mubr.f32.gmra.mrb[0].mxu0 %v254
      %v373 = vpop.f32.mrb[0].mxu0
      %v374 = vadd.f32 %v247, %v373
      %v375 = vpop.f32.mrb[0].mxu0
      %376 = vmatprep.mubr.f32.mxu0 0.0
      %377 = vmatmul.mubr.f32.gmra.mrb[0].mxu0 %v257
      %v378 = vpop.f32.mrb[0].mxu0
      %v379 = vadd.f32 %v247, %v378
      %v380 = vpop.f32.mrb[0].mxu0
      %381 = vmatprep.mubr.f32.mxu0 0.0
      %382 = vmatmul.mubr.f32.gmra.mrb[0].mxu0 %v260
      %v383 = vpop.f32.mrb[0].mxu0
      %v384 = vadd.f32 %v247, %v383
      %v385 = vpop.f32.mrb[0].mxu0
      %386 = vmatprep.mubr.f32.mxu0 0.0
      %387 = vmatmul.mubr.f32.gmra.mrb[0].mxu0 %v263
      %v388 = vpop.f32.mrb[0].mxu0
      %v389 = vadd.f32 %v247, %v388
      %v390 = vpop.f32.mrb[0].mxu0
      %391 = vmatprep.mubr.f32.mxu0 0.0
      %392 = vmatmul.mubr.f32.gmra.mrb[0].mxu0 %v266
      %v393 = vpop.f32.mrb[0].mxu0
      %v394 = vadd.f32 %v247, %v393
      %v395 = vpop.f32.mrb[0].mxu0
      %396 = vmatprep.mubr.f32.mxu0 0.0
      %397 = vmatmul.mubr.f32.gmra.mrb[0].mxu0 %v269
      %v398 = vpop.f32.mrb[0].mxu0
      %v399 = vadd.f32 %v247, %v398
      %v400 = vpop.f32.mrb[0].mxu0
      %401 = vmatprep.mubr.f32.mxu0 0.0
      %402 = vmatmul.mubr.f32.gmra.mrb[0].mxu0 %v272
      %v403 = vpop.f32.mrb[0].mxu0
      %v404 = vadd.f32 %v247, %v403
      %v405 = vpop.f32.mrb[0].mxu0
      %406 = vmatprep.mubr.f32.mxu0 0.0
      %407 = vmatmul.mubr.f32.gmra.mrb[0].mxu0 %v275
      %v408 = vpop.f32.mrb[0].mxu0
      %v409 = vadd.f32 %v247, %v408
      %v410 = vpop.f32.mrb[0].mxu0
      %411 = vmatprep.mubr.f32.mxu0 0.0
      %412 = vmatmul.mubr.f32.gmra.mrb[0].mxu0 %v278
      %v413 = vpop.f32.mrb[0].mxu0
      %v414 = vadd.f32 %v247, %v413
      %v415 = vpop.f32.mrb[0].mxu0
      %416 = vmatprep.mubr.f32.mxu0 0.0
      %417 = vmatmul.mubr.f32.gmra.mrb[0].mxu0 %v281
      %v418 = vpop.f32.mrb[0].mxu0
      %v419 = vadd.f32 %v247, %v418
      %v420 = vpop.f32.mrb[0].mxu0
      %421 = vmatprep.mubr.f32.mxu0 0.0
      %422 = vmatmul.mubr.f32.gmra.mrb[0].mxu0 %v284
      %v423 = vpop.f32.mrb[0].mxu0
      %v424 = vadd.f32 %v247, %v423
      %v425 = vpop.f32.mrb[0].mxu0
      %426 = vmatprep.mubr.f32.mxu0 0.0
      %427 = vmatmul.mubr.f32.gmra.mrb[0].mxu0 %v287
      %v428 = vpop.f32.mrb[0].mxu0
      %v429 = vadd.f32 %v247, %v428
      %v430 = vpop.f32.mrb[0].mxu0
      %431 = vmatprep.mubr.f32.mxu0 0.0
      %432 = vmatmul.mubr.f32.gmra.mrb[0].mxu0 %v290
      %v433 = vpop.f32.mrb[0].mxu0
      %v434 = vadd.f32 %v247, %v433
      %v435 = vpop.f32.mrb[0].mxu0
      %436 = vmatprep.mubr.f32.mxu0 0.0
      %437 = vmatmul.mubr.f32.gmra.mrb[0].mxu0 %v293
      %v438 = vpop.f32.mrb[0].mxu0
      %v439 = vadd.f32 %v247, %v438
      %v440 = vpop.f32.mrb[0].mxu0
      %441 = vmatprep.mubr.f32.mxu0 0.0
      %442 = vmatmul.mubr.f32.gmra.mrb[0].mxu0 %v296
      %v443 = vpop.f32.mrb[0].mxu0
      %v444 = vadd.f32 %v247, %v443
      %v445 = vpop.f32.mrb[0].mxu0
      %446 = vdwg.mxu0
      %v447 = vmax.f32 %v369, 0.0
      %v448 = vmax.f32 %v374, 0.0
      %v449 = vmax.f32 %v379, 0.0
      %v450 = vmax.f32 %v384, 0.0
      %v451 = vmax.f32 %v389, 0.0
      %v452 = vmax.f32 %v394, 0.0
      %v453 = vmax.f32 %v399, 0.0
      %v454 = vmax.f32 %v404, 0.0
      %v455 = vmax.f32 %v409, 0.0
      %v456 = vmax.f32 %v414, 0.0
      %v457 = vmax.f32 %v419, 0.0
      %v458 = vmax.f32 %v424, 0.0
      %v459 = vmax.f32 %v429, 0.0
      %v460 = vmax.f32 %v434, 0.0
      %v461 = vmax.f32 %v439, 0.0
      %v462 = vmax.f32 %v444, 0.0
      %v463 = vld [vmem:[%s3] sm:$0xff]
      %v464 = vld [vmem:[%s4] sm:$0xff]
      %466 = vset.pattern.permute.xlu0 0
      %467 = vperm.xlu0 %466, %v464
      %v468 = vpop.permute.xlu0 %467
      %470 = vmatprep.subr.mxu0 0.0
      %471 = vmatpush1.xpose.msra.mxu0 %v447
      %472 = vmatprep.subr.mxu0 0.0
      %473 = vmatpush1.xpose.msra.mxu0 %v448
      %474 = vmatprep.subr.mxu0 0.0
      %475 = vmatpush1.xpose.msra.mxu0 %v449
      %476 = vmatprep.subr.mxu0 0.0
      %477 = vmatpush1.xpose.msra.mxu0 %v450
      %478 = vmatprep.subr.mxu0 0.0
      %479 = vmatpush1.xpose.msra.mxu0 %v451
      %480 = vmatprep.subr.mxu0 0.0
      %481 = vmatpush1.xpose.msra.mxu0 %v452
      %482 = vmatprep.subr.mxu0 0.0
      %483 = vmatpush1.xpose.msra.mxu0 %v453
      %484 = vmatprep.subr.mxu0 0.0
      %485 = vmatpush1.xpose.msra.mxu0 %v454
      %486 = vmatprep.subr.mxu0 0.0
      %487 = vmatpush1.xpose.msra.mxu0 %v455
      %488 = vmatprep.subr.mxu0 0.0
      %489 = vmatpush1.xpose.msra.mxu0 %v456
      %490 = vmatprep.subr.mxu0 0.0
      %491 = vmatpush1.xpose.msra.mxu0 %v457
      %492 = vmatprep.subr.mxu0 0.0
      %493 = vmatpush1.xpose.msra.mxu0 %v458
      %494 = vmatprep.subr.mxu0 0.0
      %495 = vmatpush1.xpose.msra.mxu0 %v459
      %496 = vmatprep.subr.mxu0 0.0
      %497 = vmatpush1.xpose.msra.mxu0 %v460
      %498 = vmatprep.subr.mxu0 0.0
      %499 = vmatpush1.xpose.msra.mxu0 %v461
      %500 = vmatprep.subr.mxu0 0.0
      %501 = vmatpush1.xpose.msra.mxu0 %v462
      %502 = vmatprep.subr.mxu0 0.0
      %503 = vmatpush1.xpose.msra.mxu0 0.0
      %504 = vmatprep.subr.mxu0 0.0
      %505 = vmatpush1.xpose.msra.mxu0 0.0
      %506 = vmatprep.subr.mxu0 0.0
      %507 = vmatpush1.xpose.msra.mxu0 0.0
      %508 = vmatprep.subr.mxu0 0.0
      %509 = vmatpush1.xpose.msra.mxu0 0.0
      %510 = vmatprep.subr.mxu0 0.0
      %511 = vmatpush1.xpose.msra.mxu0 0.0
      %512 = vmatprep.subr.mxu0 0.0
      %513 = vmatpush1.xpose.msra.mxu0 0.0
      %514 = vmatprep.subr.mxu0 0.0
      %515 = vmatpush1.xpose.msra.mxu0 0.0
      %516 = vmatprep.subr.mxu0 0.0
      %517 = vmatpush1.xpose.msra.mxu0 0.0
      %518 = vmatprep.subr.mxu0 0.0
      %519 = vmatpush1.xpose.msra.mxu0 0.0
      %520 = vmatprep.subr.mxu0 0.0
      %521 = vmatpush1.xpose.msra.mxu0 0.0
      %522 = vmatprep.subr.mxu0 0.0
      %523 = vmatpush1.xpose.msra.mxu0 0.0
      %524 = vmatprep.subr.mxu0 0.0
      %525 = vmatpush1.xpose.msra.mxu0 0.0
      %526 = vmatprep.subr.mxu0 0.0
      %527 = vmatpush1.xpose.msra.mxu0 0.0
      %528 = vmatprep.subr.mxu0 0.0
      %529 = vmatpush1.xpose.msra.mxu0 0.0
      %530 = vmatprep.subr.mxu0 0.0
      %531 = vmatpush1.xpose.msra.mxu0 0.0
      %532 = vmatprep.subr.mxu0 0.0
      %533 = vmatpush1.xpose.msra.mxu0 0.0
      %534 = vmatprep.mubr.f32.mxu0 0.0
      %535 = vmatmul.mubr.f32.gmra.mrb[0].mxu0 %v463
      %v536 = vpop.f32.mrb[0].mxu0
      %v537 = vadd.f32 %v468, %v536
      %v538 = vpop.f32.mrb[0].mxu0
      %539 = vdwg.mxu0
      %540 = vst [vmem:[%s224] sm:$0xff] %v537
      %p541 = scmp.lt.s32.totalorder %s16, 1
      %s542 = scalar_select %p541, %s16, 1
      %s543 = smul.addr %s542, 8
      %s544 = scalar_lea.vmem %s5, %s543
      // Predicated region
      $region41: #{net_two_class_forward.1} parent=39 // pred_check
        %p545 = pneg %p144
      $region42: #{net_two_class_forward.1} parent=39 // pred_check_branch
        %547 = sbr.rel (%p545) target = $region44
      $region43: #{net_two_class_forward.1} parent=39 // pred_region
        _
      $region44: #{net_two_class_forward.1} parent=39 // pred_fallthru
        _
    $region40: #{net_two_class_forward.1} parent=5 // pred_fallthru
      _
    %p548 = scmp.le.s32.totalorder 2, %s11
    // Predicated region
    $region45: #{net_two_class_forward.1} parent=5 // pred_check
      %p549 = pneg %p548
    $region46: #{net_two_class_forward.1} parent=5 // pred_check_branch
      %551 = sbr.rel (%p549) target = $region48
    $region47: #{net_two_class_forward.1} parent=5 // pred_region
      %s552 = ssub.s32 %s11, 2
      // Predicated region
      $region49: #{net_two_class_forward.1} parent=47 // pred_check
        %p553 = pneg %p150
      $region50: #{net_two_class_forward.1} parent=47 // pred_check_branch
        %555 = sbr.rel (%p553) target = $region52
      $region51: #{net_two_class_forward.1} parent=47 // pred_region
        %p556 = scmp.lt.s32.totalorder %s17, 1
        %s557 = scalar_select %p556, %s17, 1
        %s558 = smul.addr %s557, 8
        %s559 = scalar_lea.vmem %s5, %s558
      $region52: #{net_two_class_forward.1} parent=47 // pred_fallthru
        _
    $region48: #{net_two_class_forward.1} parent=5 // pred_fallthru
      _
  $region6: #{net_two_class_forward.1} parent=0 // loop_footer
    %s15 = sadd.s32 1, %s11
  $region7: #{net_two_class_forward.1} parent=0 // loop_footer_branch
    %10 = sbr.rel target = $region3
  $region8: #{net_two_class_forward.1} parent=0 // loop_exit
    _

</llo_original>
